<compile_context>
chip_gen: v7x
topology: tpu7x:2x2x1
jax: 0.10.0
libtpu: 0.0.40
codegen_flags: <defaults>
</compile_context>

<pallas_src>
import functools

import jax
import jax.numpy as jnp
from jax.experimental import pallas as pl
from jax.experimental.pallas import tpu as pltpu


# ---------------------------------------------------------------------------
# Pallas kernel 1: patchify conv as a tiled (Cout, K) @ (K, TILE_M) matmul.
# Output tile (Cout, TILE_M): the lane dim is TILE_M (>=128 for non-toy sizes)
# so feature stores are lane-dense.  Weights / bias are grid-resident.
# ---------------------------------------------------------------------------
def _patchify_matmul_kernel(w_ref, b_ref, x_ref, o_ref):
    acc = jnp.dot(w_ref[...], x_ref[...], preferred_element_type=jnp.float32)
    o_ref[...] = acc + b_ref[...]


def patchify_conv(x_nchw, weight, bias, stride):
    """Conv2d(C_in, C_out, kernel=stride, stride=stride) on NCHW input.

    Requires H % stride == 0 and W % stride == 0 (padded batches satisfy this;
    PyTorch Conv2d would floor instead)."""
    N, C, H, W = x_nchw.shape
    Cout = weight.shape[0]
    s = stride
    Ho, Wo = H // s, W // s
    M = N * Ho * Wo
    K = C * s * s

    # im2col built directly in (K, M) orientation (one wrapper pass); the
    # matmul result is then (Cout, M) and going back to NCHW is only a cheap
    # leading-axes swap, not a full layout change.
    p = x_nchw.reshape(N, C, Ho, s, Wo, s)
    p = jnp.transpose(p, (1, 3, 5, 0, 2, 4))            # (C, s, s, N, Ho, Wo)
    patches_t = p.reshape(K, M)

    w2d = weight.reshape(Cout, K)
    b2d = bias.reshape(Cout, 1)

    # Tile the M (lane) axis.  512 columns keeps double-buffered VMEM use far
    # below the scoped limit on every generation (v5e 16 MiB .. v7x 32 MiB of
    # 64 MiB physical) while staying near the HBM roofline; small problems
    # fall back to a single full-extent block (allowed by the (8,128) rule).
    tile_m = 512 if M >= 512 else M
    grid_m = pl.cdiv(M, tile_m)

    out = pl.pallas_call(
        _patchify_matmul_kernel,
        out_shape=jax.ShapeDtypeStruct((Cout, M), jnp.float32),
        grid=(grid_m,),
        in_specs=[
            pl.BlockSpec((Cout, K), lambda i: (0, 0)),   # weights resident
            pl.BlockSpec((Cout, 1), lambda i: (0, 0)),   # bias resident
            pl.BlockSpec((K, tile_m), lambda i: (0, i)),
        ],
        out_specs=pl.BlockSpec((Cout, tile_m), lambda i: (0, i)),
        compiler_params=pltpu.CompilerParams(
            dimension_semantics=("parallel",)),
    )(w2d, b2d, patches_t)

    out = out.reshape(Cout, N, Ho, Wo)
    return jnp.transpose(out, (1, 0, 2, 3))              # back to NCHW


# ---------------------------------------------------------------------------
# Pallas kernel 2: fused mask_out_padding for ALL feature levels at once.
#   mask[n, h, w] = NOT (h < ceil(img_h/stride) AND w < ceil(img_w/stride))
# One grid step per image; one pallas_call total (instead of one per level).
# image_sizes arrives as a flat 1-D (2N,) int32 SMEM buffer (no 2-D padding).
# ---------------------------------------------------------------------------
def _masks_kernel(sizes_ref, *out_refs, strides):
    b = pl.program_id(0)
    h_img = sizes_ref[2 * b]
    w_img = sizes_ref[2 * b + 1]
    for o_ref, s in zip(out_refs, strides):
        # integer ceil-div == int(np.ceil(float(h) / s)) for positive ints
        hlim = (h_img + s - 1) // s
        wlim = (w_img + s - 1) // s
        _, H, W = o_ref.shape
        rows = jax.lax.broadcasted_iota(jnp.int32, (1, H, W), 1)
        cols = jax.lax.broadcasted_iota(jnp.int32, (1, H, W), 2)
        valid = (rows < hlim) & (cols < wlim)
        # 0 = valid image region, 1 = padding; int8 to minimize HBM writeback
        o_ref[...] = jnp.where(valid, 0, 1).astype(jnp.int8)


def mask_out_padding_all_levels(image_sizes, feat_shapes, strides):
    N = feat_shapes[0][0]
    hw = [(shp[2], shp[3]) for shp in feat_shapes]
    sizes_flat = image_sizes.reshape(-1).astype(jnp.int32)

    kernel = functools.partial(_masks_kernel, strides=tuple(strides))
    out_shapes = tuple(
        jax.ShapeDtypeStruct((N, H, W), jnp.int8) for (H, W) in hw)
    out_specs = [
        pl.BlockSpec((1, H, W), lambda b, sizes: (b, 0, 0)) for (H, W) in hw]

    masks = pl.pallas_call(
        kernel,
        out_shape=out_shapes,
        grid_spec=pltpu.PrefetchScalarGridSpec(
            num_scalar_prefetch=1,          # image_sizes -> SMEM
            grid=(N,),
            in_specs=[],
            out_specs=out_specs,
        ),
        compiler_params=pltpu.CompilerParams(
            dimension_semantics=("parallel",)),
    )(sizes_flat)
    # torch.bool semantics for downstream; cast is a tiny int8 elementwise op.
    return [m.astype(jnp.bool_) for m in masks]


# ---------------------------------------------------------------------------
# MaskedBackbone (JAX / Pallas version)
# ---------------------------------------------------------------------------
class MaskedBackbone:
    """Thin wrapper producing multi-level features + padding masks."""

    def __init__(self, in_channels=4, num_channels=32,
                 feature_strides=(2, 4, 8), key=None):
        if key is None:
            key = jax.random.PRNGKey(0)
        self.feature_strides = list(feature_strides)
        self.num_channels = num_channels
        self.level_names = [f"p{i}" for i in range(len(feature_strides))]
        self.params = []
        for s in feature_strides:
            wkey, bkey, key = jax.random.split(key, 3)
            w = 0.02 * jax.random.normal(
                wkey, (num_channels, in_channels, s, s), dtype=jnp.float32)
            b = 0.01 * jax.random.normal(
                bkey, (num_channels,), dtype=jnp.float32)
            self.params.append((w, b))

    def __call__(self, images_tensor, image_sizes):
        """images_tensor: (N, C, H, W) float32 padded batch (NCHW).
        image_sizes: (N, 2) int32 array of true (h, w) per image.
        Returns dict: level -> (features NCHW float32, mask (N,H_l,W_l) bool).
        """
        features = {}
        feat_shapes = []
        for name, stride, (w, b) in zip(self.level_names,
                                        self.feature_strides, self.params):
            feat = patchify_conv(images_tensor, w, b, stride)
            features[name] = feat
            feat_shapes.append(feat.shape)

        masks = mask_out_padding_all_levels(
            image_sizes, feat_shapes, self.feature_strides)

        assert len(features) == len(masks)
        out = {}
        for i, k in enumerate(features.keys()):
            out[k] = (features[k], masks[i])     # NestedTensor(tensors, mask)
        return out


# ---------------------------------------------------------------------------
if __name__ == "__main__":
    key = jax.random.PRNGKey(0)
    xkey, pkey = jax.random.split(key)

    N, C, H, W = 2, 4, 16, 16
    images = jax.random.normal(xkey, (N, C, H, W), dtype=jnp.float32)
    # true (h, w) sizes of each image before padding to 16x16
    image_sizes = jnp.array([[13, 15], [16, 10]], dtype=jnp.int32)

    model = MaskedBackbone(in_channels=C, num_channels=32,
                           feature_strides=(2, 4, 8), key=pkey)
    result = model(images, image_sizes)

    for name, stride in zip(model.level_names, model.feature_strides):
        feat, mask = result[name]
        feat = jax.block_until_ready(feat)
        mask = jax.block_until_ready(mask)
        Hl, Wl = H // stride, W // stride
        assert feat.shape == (N, model.num_channels, Hl, Wl)
        assert feat.dtype == jnp.float32
        assert mask.shape == (N, Hl, Wl)
        assert mask.dtype == jnp.bool_
        # image 0: h=13, w=15 -> mask False inside the ceil region
        hlim0 = -(-13 // stride)
        wlim0 = -(-15 // stride)
        assert not bool(mask[0, :hlim0, :wlim0].any())
        # image 1: h=16, w=10 -> padded columns must be True
        wlim1 = -(-10 // stride)
        if wlim1 < Wl:
            assert bool(mask[1, :, wlim1:].all())

    print("KERNEL_OK")
</pallas_src>

<mosaic_0001>
module attributes {stable_mosaic.version = 11 : i64} {
  func.func @_patchify_matmul_kernel(%arg0: i32, %arg1: memref<32x16xf32, #tpu.memory_space<vmem>>, %arg2: memref<32x1xf32, #tpu.memory_space<vmem>>, %arg3: memref<16x128xf32, #tpu.memory_space<vmem>>, %arg4: memref<32x128xf32, #tpu.memory_space<vmem>>) attributes {dimension_semantics = [#tpu.dimension_semantics<parallel>], iteration_bounds = array<i64: 1>, scalar_prefetch = 0 : i64, scratch_operands = 0 : i64, tpu.core_type = #tpu.core_type<tc>, window_params = [{pipeline_mode = #tpu.pipeline_mode<synchronous>, transform_indices = @transform_0, window_bounds = array<i64: 32, 16>}, {pipeline_mode = #tpu.pipeline_mode<synchronous>, transform_indices = @transform_1, window_bounds = array<i64: 32, 1>}, {transform_indices = @transform_2, window_bounds = array<i64: 16, 128>}, {transform_indices = @transform_3, window_bounds = array<i64: 32, 128>}]} {
    %c0 = arith.constant 0 : index
    %c0_0 = arith.constant 0 : index
    %0 = vector.load %arg1[%c0, %c0_0] : memref<32x16xf32, #tpu.memory_space<vmem>>, vector<32x16xf32>
    %c0_1 = arith.constant 0 : index
    %c0_2 = arith.constant 0 : index
    %1 = vector.load %arg3[%c0_1, %c0_2] : memref<16x128xf32, #tpu.memory_space<vmem>>, vector<16x128xf32>
    %cst = arith.constant dense<0.000000e+00> : vector<32x128xf32>
    %2 = tpu.matmul %0, %1, %cst {dimension_numbers = #tpu.dot_dimension_numbers<[1], [0], [0], [1], [0, 0, 1, 1], [], []>} : vector<32x16xf32>, vector<16x128xf32>, vector<32x128xf32> -> vector<32x128xf32>
    %c0_3 = arith.constant 0 : index
    %c0_4 = arith.constant 0 : index
    %3 = vector.load %arg2[%c0_3, %c0_4] : memref<32x1xf32, #tpu.memory_space<vmem>>, vector<32x1xf32>
    %4 = vector.broadcast %3 : vector<32x1xf32> to vector<32x128xf32>
    %5 = arith.addf %2, %4 : vector<32x128xf32>
    %c0_5 = arith.constant 0 : index
    %c0_6 = arith.constant 0 : index
    %6 = vector.load %arg4[%c0_5, %c0_6] : memref<32x128xf32, #tpu.memory_space<vmem>>, vector<32x128xf32>
    tpu.vector_store %arg4[%c0_5, %c0_6], %5 {strides = array<i32>} : memref<32x128xf32, #tpu.memory_space<vmem>>, vector<32x128xf32>,
    return
  }
  func.func @transform_0(%arg0: i32) -> (i32, i32) {
    %c0_i32 = arith.constant 0 : i32
    %c0_i32_0 = arith.constant 0 : i32
    %c0_i32_1 = arith.constant 0 : i32
    return %c0_i32, %c0_i32_0 : i32, i32
  }
  func.func @transform_1(%arg0: i32) -> (i32, i32) {
    %c0_i32 = arith.constant 0 : i32
    %c0_i32_0 = arith.constant 0 : i32
    %c0_i32_1 = arith.constant 0 : i32
    return %c0_i32, %c0_i32_0 : i32, i32
  }
  func.func @transform_2(%arg0: i32) -> (i32, i32) {
    %c0_i32 = arith.constant 0 : i32
    %c0_i32_0 = arith.constant 0 : i32
    return %c0_i32, %arg0 : i32, i32
  }
  func.func @transform_3(%arg0: i32) -> (i32, i32) {
    %c0_i32 = arith.constant 0 : i32
    %c0_i32_0 = arith.constant 0 : i32
    return %c0_i32, %arg0 : i32, i32
  }
}

</mosaic_0001>

<llo_original>
// kernel: tpu_custom_call.1
$region0: #{tpu_custom_call.1}
  #allocation0 [shape = 'u32[]', space=smem, size = 0x4, offset = 0x4, fixed_abs, tag = 'smem constant byte address 0x4 - core index']
  #allocation1 [shape = 'u32[144,128]{1,0:T(1,128)}', space=vmem, size = 0x12000, scoped, tag = 'internal scratch']
  %s0 = inlined_call_operand.vmem [shape: f32[32,16], index: 0, kind: input, shape index: {}]
  %s1 = inlined_call_operand.vmem [shape: f32[32,1], index: 1, kind: input, shape index: {}]
  %s2 = inlined_call_operand.vmem [shape: f32[16,128], index: 2, kind: input, shape index: {}]
  %s3 = inlined_call_operand.hbm [shape: f32[32,128], index: 3, kind: output, shape index: {}]
  %s4 = sld [smem:[#allocation0]]
  $region22: #{tpu_custom_call.1} parent=0
    _
  %s6 = ssub.s32 1, %s4
  %s7 = scalar_select 0, %s6, %s4
  $region1: #{tpu_custom_call.1} parent=0
    #allocation2 [shape = 'u8[16384]{0}', space=vmem, size = 0x4000, scoped, tag = 'output window, operand 0, single buffered']
    #allocation3 [shape = 's32[1]{0}', space=sflag, size = 0x4, scoped, tag = 'scoped memory for tpu_custom_call.1']
    %8 = vsyncpa [#allocation3], 0
    // Predicated region
    $region2: #{tpu_custom_call.1} parent=1 // pred_check
      _
    $region3: #{tpu_custom_call.1} parent=1 // pred_check_branch
      %10 = sbr.rel (0) target = $region5
    $region4: #{tpu_custom_call.1} parent=1 // pred_region
      _
    $region5: #{tpu_custom_call.1} parent=1 // pred_fallthru
      _
    // Predicated region
    $region6: #{tpu_custom_call.1} parent=1 // pred_check
      _
    $region7: #{tpu_custom_call.1} parent=1 // pred_check_branch
      %12 = sbr.rel (0) target = $region9
    $region8: #{tpu_custom_call.1} parent=1 // pred_region
      _
    $region9: #{tpu_custom_call.1} parent=1 // pred_fallthru
      _
    // Predicated region
    $region10: #{tpu_custom_call.1} parent=1 // pred_check
      _
    $region11: #{tpu_custom_call.1} parent=1 // pred_check_branch
      %14 = sbr.rel (0) target = $region13
    $region12: #{tpu_custom_call.1} parent=1 // pred_region
      _
    $region13: #{tpu_custom_call.1} parent=1 // pred_fallthru
      _
    %v15 = vld [vmem:[%s0] sm:$0xff]
    %v16 = vld [vmem:[%s0 + $0x8] sm:$0xff]
    %v17 = vld [vmem:[%s0 + $0x10] sm:$0xff]
    %v18 = vld [vmem:[%s0 + $0x18] sm:$0xff]
    %v19 = vld [vmem:[%s2] sm:$0xff]
    %v20 = vld [vmem:[%s2 + $0x8] sm:$0xff]
    %v21 = vld [vmem:[%s1] sm:$0xff]
    %v22 = vld [vmem:[%s1 + $0x8] sm:$0xff]
    %v23 = vld [vmem:[%s1 + $0x10] sm:$0xff]
    %v24 = vld [vmem:[%s1 + $0x18] sm:$0xff]
    %26 = vset.pattern.permute.xlu0 0
    %27 = vperm.xlu0 %26, %v21
    %v28 = vpop.permute.xlu0 %27
    %31 = vset.pattern.permute.xlu0 0
    %32 = vperm.xlu0 %31, %v22
    %v33 = vpop.permute.xlu0 %32
    %36 = vset.pattern.permute.xlu0 0
    %37 = vperm.xlu0 %36, %v23
    %v38 = vpop.permute.xlu0 %37
    %41 = vset.pattern.permute.xlu0 0
    %42 = vperm.xlu0 %41, %v24
    %v43 = vpop.permute.xlu0 %42
    %vm45 = vcmask 130048
    %v47 = vsel %vm45, %v15, 0
    %v50 = vsel %vm45, %v16, 0
    %v53 = vsel %vm45, %v17, 0
    %v56 = vsel %vm45, %v18, 0
    %58 = vmatprep.subr.mxu0 0.0
    %59 = vmatpush1.msra.mxu0 %v19
    %60 = vmatprep.subr.mxu0 0.0
    %61 = vmatpush1.msra.mxu0 %v20
    %62 = vmatprep.subr.mxu0 0.0
    %63 = vmatpush1.msra.mxu0 0.0
    %64 = vmatprep.subr.mxu0 0.0
    %65 = vmatpush1.msra.mxu0 0.0
    %66 = vmatprep.subr.mxu0 0.0
    %67 = vmatpush1.msra.mxu0 0.0
    %68 = vmatprep.subr.mxu0 0.0
    %69 = vmatpush1.msra.mxu0 0.0
    %70 = vmatprep.subr.mxu0 0.0
    %71 = vmatpush1.msra.mxu0 0.0
    %72 = vmatprep.subr.mxu0 0.0
    %73 = vmatpush1.msra.mxu0 0.0
    %74 = vmatprep.subr.mxu0 0.0
    %75 = vmatpush1.msra.mxu0 0.0
    %76 = vmatprep.subr.mxu0 0.0
    %77 = vmatpush1.msra.mxu0 0.0
    %78 = vmatprep.subr.mxu0 0.0
    %79 = vmatpush1.msra.mxu0 0.0
    %80 = vmatprep.subr.mxu0 0.0
    %81 = vmatpush1.msra.mxu0 0.0
    %82 = vmatprep.subr.mxu0 0.0
    %83 = vmatpush1.msra.mxu0 0.0
    %84 = vmatprep.subr.mxu0 0.0
    %85 = vmatpush1.msra.mxu0 0.0
    %86 = vmatprep.subr.mxu0 0.0
    %87 = vmatpush1.msra.mxu0 0.0
    %88 = vmatprep.subr.mxu0 0.0
    %89 = vmatpush1.msra.mxu0 0.0
    %90 = vmatprep.subr.mxu0 0.0
    %91 = vmatpush1.msra.mxu0 0.0
    %92 = vmatprep.subr.mxu0 0.0
    %93 = vmatpush1.msra.mxu0 0.0
    %94 = vmatprep.subr.mxu0 0.0
    %95 = vmatpush1.msra.mxu0 0.0
    %96 = vmatprep.subr.mxu0 0.0
    %97 = vmatpush1.msra.mxu0 0.0
    %98 = vmatprep.subr.mxu0 0.0
    %99 = vmatpush1.msra.mxu0 0.0
    %100 = vmatprep.subr.mxu0 0.0
    %101 = vmatpush1.msra.mxu0 0.0
    %102 = vmatprep.subr.mxu0 0.0
    %103 = vmatpush1.msra.mxu0 0.0
    %104 = vmatprep.subr.mxu0 0.0
    %105 = vmatpush1.msra.mxu0 0.0
    %106 = vmatprep.subr.mxu0 0.0
    %107 = vmatpush1.msra.mxu0 0.0
    %108 = vmatprep.subr.mxu0 0.0
    %109 = vmatpush1.msra.mxu0 0.0
    %110 = vmatprep.subr.mxu0 0.0
    %111 = vmatpush1.msra.mxu0 0.0
    %112 = vmatprep.subr.mxu0 0.0
    %113 = vmatpush1.msra.mxu0 0.0
    %114 = vmatprep.subr.mxu0 0.0
    %115 = vmatpush1.msra.mxu0 0.0
    %116 = vmatprep.subr.mxu0 0.0
    %117 = vmatpush1.msra.mxu0 0.0
    %118 = vmatprep.subr.mxu0 0.0
    %119 = vmatpush1.msra.mxu0 0.0
    %120 = vmatprep.subr.mxu0 0.0
    %121 = vmatpush1.msra.mxu0 0.0
    %122 = vmatprep.mubr.f32.mxu0 0.0
    %123 = vmatmul.mubr.f32.gmra.mrb[0].mxu0 %v47
    %v124 = vpop.f32.mrb[0].mxu0
    %v125 = vadd.f32 %v28, %v124
    %v126 = vpop.f32.mrb[0].mxu0
    %127 = vmatprep.mubr.f32.mxu0 0.0
    %128 = vmatmul.mubr.f32.gmra.mrb[0].mxu0 %v50
    %v129 = vpop.f32.mrb[0].mxu0
    %v130 = vadd.f32 %v33, %v129
    %v131 = vpop.f32.mrb[0].mxu0
    %132 = vmatprep.mubr.f32.mxu0 0.0
    %133 = vmatmul.mubr.f32.gmra.mrb[0].mxu0 %v53
    %v134 = vpop.f32.mrb[0].mxu0
    %v135 = vadd.f32 %v38, %v134
    %v136 = vpop.f32.mrb[0].mxu0
    %137 = vmatprep.mubr.f32.mxu0 0.0
    %138 = vmatmul.mubr.f32.gmra.mrb[0].mxu0 %v56
    %v139 = vpop.f32.mrb[0].mxu0
    %v140 = vadd.f32 %v43, %v139
    %v141 = vpop.f32.mrb[0].mxu0
    %142 = vdwg.mxu0
    %143 = vst [vmem:[#allocation2] sm:$0xff] %v125
    %144 = vst [vmem:[#allocation2 + $0x8] sm:$0xff] %v130
    %145 = vst [vmem:[#allocation2 + $0x10] sm:$0xff] %v135
    %146 = vst [vmem:[#allocation2 + $0x18] sm:$0xff] %v140
    // Predicated region
    $region14: #{tpu_custom_call.1} parent=1 // pred_check
      _
    $region15: #{tpu_custom_call.1} parent=1 // pred_check_branch
      %148 = sbr.rel (0) target = $region17
    $region16: #{tpu_custom_call.1} parent=1 // pred_region
      %s150 = ssub.s32 512, 512
      %151 = vsyncadd [#allocation3], %s150
      %s152 = sshll.u32 [#allocation2], 4
      %s153 = int_to_ptr.vmem [resolvable:$true] %s152
      %158 = dma.vmem_to_hbm [thread:$0]  %s153, 512, %s3, [#allocation3], 128, 128, 8
    $region17: #{tpu_custom_call.1} parent=1 // pred_fallthru
      _
    // Predicated region
    $region18: #{tpu_custom_call.1} parent=1 // pred_check
      _
    $region19: #{tpu_custom_call.1} parent=1 // pred_check_branch
      %160 = sbr.rel (0) target = $region21
    $region20: #{tpu_custom_call.1} parent=1 // pred_region
      %161 = dma.done [#allocation3], 512
    $region21: #{tpu_custom_call.1} parent=1 // pred_fallthru
      _
    %162 = vsyncpa [#allocation3], 1

</llo_original>
